<compile_context>
chip_gen: v7x
topology: tpu7x:2x2x1
jax: 0.10.0
libtpu: 0.0.40
codegen_flags: <defaults>
</compile_context>

<pallas_src>
import numpy as np

import jax
import jax.numpy as jnp
from jax.experimental import pallas as pl
from jax.experimental.pallas import tpu as pltpu


def _round_up(n, m):
    return -(-n // m) * m


def _cdiv(a, b):
    return -(-a // b)


def _choose_rows_per_chunk(h, w, itemsize, budget_bytes):
    """Image rows packed into one lane-dense work row (8 rows/block must fit)."""
    max_lane_elems = max(128, budget_bytes // (8 * itemsize))
    if _round_up(h * w, 128) <= max_lane_elems:
        return h                                  # whole plane per work row
    r = max(1, (max_lane_elems - 127) // w)
    # TODO(synk): a single image row wider than the block budget would need
    # additional W-tiling; r == 1 is the floor here.
    return min(r, h)


def _choose_block_rows(n_rows, row_bytes, budget_bytes):
    """Block height p (multiple of 8, <= budget) and grid size g = cdiv(n, p)."""
    p_budget = max(8, (budget_bytes // max(row_bytes, 1)) // 8 * 8)
    p_cap = min(p_budget, _round_up(n_rows, 8))
    # ~0.35 us fixed per-grid-step overhead expressed as equivalent HBM rows.
    step_rows = _cdiv(512 * 1024, max(row_bytes, 1))
    best_p, best_score = 8, None
    for cand in range(8, p_cap + 1, 8):
        g = _cdiv(n_rows, cand)
        score = (g * cand - n_rows) + g * step_rows   # pad traffic + step cost
        if best_score is None or score < best_score or (
                score == best_score and cand > best_p):
            best_p, best_score = cand, score
    g = _cdiv(n_rows, best_p)
    # Prefer >= 2 grid steps so both v7x TensorCores get work, when the extra
    # zero-padding stays cheap (neutral on single-core v5e/v6e).
    if g == 1 and n_rows > 8:
        p_half = _round_up(_cdiv(n_rows, 2), 8)
        if p_half <= p_budget and 2 * p_half - n_rows <= max(8, n_rows // 8):
            best_p, g = p_half, 2
    return best_p, g


def _make_tv_kernel(shift_h, shift_w, has_h, has_w):
    def tv_kernel(x_ref, mh_ref, mw_ref, o_ref):
        x = x_ref[...].astype(jnp.float32)            # (P, L) lane-dense block
        s_h = jnp.float32(0.0)
        s_w = jnp.float32(0.0)
        if has_h:
            # Same-column pixel one image row below sits w lanes to the right
            # -> cheap XLU rotation, masked multiply-accumulate on the VPU.
            d = jnp.abs(pltpu.roll(x, shift_h, axis=1) - x)
            s_h = jnp.sum(d * mh_ref[...])
        if has_w:
            d = jnp.abs(pltpu.roll(x, shift_w, axis=1) - x)
            s_w = jnp.sum(d * mw_ref[...])
        # Lane-aligned per-block partials: lane 0 = height sum, lane 1 = width.
        lane = jax.lax.broadcasted_iota(jnp.int32, o_ref.shape, 2)
        o_ref[...] = jnp.where(lane == 0, s_h, 0.0) + jnp.where(lane == 1, s_w, 0.0)
    return tv_kernel


def total_variation_loss(x, *, block_budget_bytes=12 * 1024 * 1024,
                         compute_dtype=None):
    """x: float array [b, c, h, w]. Returns a scalar of x.dtype."""
    b, c, h, w = x.shape
    n_planes = b * c
    out_dtype = x.dtype
    if compute_dtype is not None:           # optional bf16 streaming (v5e BW)
        x = x.astype(compute_dtype)
    itemsize = jnp.dtype(x.dtype).itemsize

    x_img = x.reshape(n_planes, h, w)

    # ---- layout: r image rows per lane-dense work row (chunk) ----
    r = _choose_rows_per_chunk(h, w, itemsize, block_budget_bytes)
    cpp = _cdiv(h, r)                       # chunks per plane
    h_pad = cpp * r
    x_pad = x_img if h_pad == h else jnp.pad(x_img, ((0, 0), (0, h_pad - h), (0, 0)))
    x_flat = x_pad.reshape(n_planes * cpp, r * w)

    L0 = r * w
    L = _round_up(L0, 128)                  # lane-aligned work-row length
    if L != L0:
        x_flat = jnp.pad(x_flat, ((0, 0), (0, L - L0)))

    n_rows = n_planes * cpp
    p, g = _choose_block_rows(n_rows, L * itemsize, block_budget_bytes)
    n_rows_pad = g * p
    if n_rows_pad != n_rows:                # zero work rows contribute 0 TV
        x_flat = jnp.pad(x_flat, ((0, n_rows_pad - n_rows), (0, 0)))

    # ---- precomputed f32 weight masks, shared (resident) across all blocks ----
    idx = np.arange(L, dtype=np.int64)
    mask_h = jnp.asarray((idx < (r - 1) * w).astype(np.float32).reshape(1, L))
    mask_w = jnp.asarray(((idx < L0) & (idx % w != w - 1))
                         .astype(np.float32).reshape(1, L))

    has_h = r > 1
    has_w = w > 1
    shift_h = (L - w) % L                   # lane i sees lane i + w
    shift_w = (L - 1) % L                   # lane i sees lane i + 1

    partial = pl.pallas_call(
        _make_tv_kernel(shift_h, shift_w, has_h, has_w),
        out_shape=jax.ShapeDtypeStruct((g, 8, 128), jnp.float32),
        grid_spec=pltpu.PrefetchScalarGridSpec(
            num_scalar_prefetch=0,
            grid=(g,),
            in_specs=[
                pl.BlockSpec((p, L), lambda i: (i, 0)),   # p work rows / step
                pl.BlockSpec((1, L), lambda i: (0, 0)),   # h-weight mask
                pl.BlockSpec((1, L), lambda i: (0, 0)),   # w-weight mask
            ],
            out_specs=pl.BlockSpec((1, 8, 128), lambda i: (i, 0, 0)),
        ),
        compiler_params=pltpu.CompilerParams(
            dimension_semantics=("parallel",),            # no cross-step state
            vmem_limit_bytes=48 * 1024 * 1024,            # 2x12MiB blocks + masks, v7x-safe
        ),
        cost_estimate=pl.CostEstimate(
            flops=8 * n_rows_pad * L,
            transcendentals=0,
            bytes_accessed=n_rows_pad * L * itemsize + 2 * L * 4 + g * 8 * 128 * 4,
        ),
    )(x_flat, mask_h, mask_w)

    h_sum = jnp.sum(partial[:, 0, 0])
    w_sum = jnp.sum(partial[:, 0, 1])

    # ---- chunk-boundary fixups (tiny plain-JAX slices, only when chunking) ----
    bidx = np.arange(r - 1, h - 1, r)       # vertical pairs straddling chunks
    if bidx.size:
        x32 = x_img.astype(jnp.float32)
        h_sum = h_sum + jnp.sum(jnp.abs(x32[:, bidx + 1, :] - x32[:, bidx, :]))
    if h % r != 0:
        # The last real row was paired with a zero pad row inside its chunk.
        h_sum = h_sum - jnp.sum(jnp.abs(x_img[:, h - 1, :]).astype(jnp.float32))

    n_h = n_planes * (h - 1) * w
    n_w = n_planes * h * (w - 1)
    # 0/0 -> nan for degenerate h == 1 or w == 1 (torch.mean over empty tensor).
    loss = h_sum / jnp.float32(n_h) + w_sum / jnp.float32(n_w)
    return loss.astype(out_dtype)


def total_variation_loss_ref(x):
    """Pure-JAX reference matching the PyTorch module."""
    h_tv = jnp.abs(x[:, :, 1:, :] - x[:, :, :-1, :])
    w_tv = jnp.abs(x[:, :, :, 1:] - x[:, :, :, :-1])
    return h_tv.mean() + w_tv.mean()


if __name__ == "__main__":
    key = jax.random.PRNGKey(0)

    # Primary case: RGB image batch [b, 3, h, w], pixel values in [0, 1].
    x = jax.random.uniform(key, (2, 3, 16, 16), dtype=jnp.float32)
    out = jax.block_until_ready(total_variation_loss(x))
    ref = total_variation_loss_ref(x)
    assert out.shape == (), f"expected scalar, got shape {out.shape}"
    assert jnp.allclose(out, ref, atol=1e-5, rtol=1e-5), (out, ref)

    # Lane padding (h*w % 128 != 0) + work-row padding (b*c not multiple of 8).
    k1, k2 = jax.random.split(key)
    x2 = jax.random.uniform(k1, (2, 3, 7, 10), dtype=jnp.float32)
    o2 = jax.block_until_ready(total_variation_loss(x2))
    assert jnp.allclose(o2, total_variation_loss_ref(x2), atol=1e-5, rtol=1e-5)

    # Force the H-chunking path (small VMEM budget) incl. boundary fixups.
    x3 = jax.random.uniform(k2, (1, 3, 13, 130), dtype=jnp.float32)
    o3 = jax.block_until_ready(total_variation_loss(x3, block_budget_bytes=25_000))
    assert jnp.allclose(o3, total_variation_loss_ref(x3), atol=1e-5, rtol=1e-5)

    print("KERNEL_OK")
</pallas_src>

<mosaic_0001>
module attributes {stable_mosaic.version = 11 : i64} {
  func.func @tv_kernel(%arg0: i32, %arg1: memref<8x256xf32, #tpu.memory_space<vmem>>, %arg2: memref<1x256xf32, #tpu.memory_space<vmem>>, %arg3: memref<1x256xf32, #tpu.memory_space<vmem>>, %arg4: memref<1x8x128xf32, #tpu.memory_space<vmem>>) attributes {dimension_semantics = [#tpu.dimension_semantics<parallel>], iteration_bounds = array<i64: 1>, scalar_prefetch = 0 : i64, scratch_operands = 0 : i64, tpu.core_type = #tpu.core_type<tc>, window_params = [{transform_indices = @transform_0, window_bounds = array<i64: 8, 256>}, {pipeline_mode = #tpu.pipeline_mode<synchronous>, transform_indices = @transform_1, window_bounds = array<i64: 1, 256>}, {pipeline_mode = #tpu.pipeline_mode<synchronous>, transform_indices = @transform_2, window_bounds = array<i64: 1, 256>}, {transform_indices = @transform_3, window_bounds = array<i64: 1, 8, 128>}]} {
    %c0 = arith.constant 0 : index
    %c0_0 = arith.constant 0 : index
    %0 = vector.load %arg1[%c0, %c0_0] : memref<8x256xf32, #tpu.memory_space<vmem>>, vector<8x256xf32>
    %c240_i32 = arith.constant 240 : i32
    %1 = tpu.dynamic_rotate %0 by %c240_i32 dim 1 : vector<8x256xf32>, i32 -> vector<8x256xf32>
    %2 = arith.subf %1, %0 : vector<8x256xf32>
    %3 = math.absf %2 : vector<8x256xf32>
    %c0_1 = arith.constant 0 : index
    %c0_2 = arith.constant 0 : index
    %4 = vector.load %arg2[%c0_1, %c0_2] : memref<1x256xf32, #tpu.memory_space<vmem>>, vector<1x256xf32>
    %5 = vector.broadcast %4 : vector<1x256xf32> to vector<8x256xf32>
    %6 = arith.mulf %3, %5 : vector<8x256xf32>
    %7 = vector.shape_cast %6 : vector<8x256xf32> to vector<1x8x256xf32>
    %cst = arith.constant dense<0.000000e+00> : vector<1xf32>
    %8 = vector.multi_reduction <add>, %7, %cst [1, 2] : vector<1x8x256xf32> to vector<1xf32>
    %9 = vector.shape_cast %8 : vector<1xf32> to vector<1x1x1xf32>
    %10 = vector.extract %9[0, 0, 0] : f32 from vector<1x1x1xf32>
    %c255_i32 = arith.constant 255 : i32
    %11 = tpu.dynamic_rotate %0 by %c255_i32 dim 1 : vector<8x256xf32>, i32 -> vector<8x256xf32>
    %12 = arith.subf %11, %0 : vector<8x256xf32>
    %13 = math.absf %12 : vector<8x256xf32>
    %c0_3 = arith.constant 0 : index
    %c0_4 = arith.constant 0 : index
    %14 = vector.load %arg3[%c0_3, %c0_4] : memref<1x256xf32, #tpu.memory_space<vmem>>, vector<1x256xf32>
    %15 = vector.broadcast %14 : vector<1x256xf32> to vector<8x256xf32>
    %16 = arith.mulf %13, %15 : vector<8x256xf32>
    %17 = vector.shape_cast %16 : vector<8x256xf32> to vector<1x8x256xf32>
    %cst_5 = arith.constant dense<0.000000e+00> : vector<1xf32>
    %18 = vector.multi_reduction <add>, %17, %cst_5 [1, 2] : vector<1x8x256xf32> to vector<1xf32>
    %19 = vector.shape_cast %18 : vector<1xf32> to vector<1x1x1xf32>
    %20 = vector.extract %19[0, 0, 0] : f32 from vector<1x1x1xf32>
    %21 = tpu.iota {dimensions = array<i32: 2>} : vector<1x8x128xi32>
    %c0_i32 = arith.constant 0 : i32
    %22 = vector.broadcast %c0_i32 : i32 to vector<1x8x128xi32>
    %23 = arith.cmpi eq, %21, %22 : vector<1x8x128xi32>
    %cst_6 = arith.constant 0.000000e+00 : f32
    %24 = vector.broadcast %10 : f32 to vector<1x8x128xf32>
    %25 = vector.broadcast %cst_6 : f32 to vector<1x8x128xf32>
    %26 = arith.select %23, %24, %25 : vector<1x8x128xi1>, vector<1x8x128xf32>
    %c1_i32 = arith.constant 1 : i32
    %27 = vector.broadcast %c1_i32 : i32 to vector<1x8x128xi32>
    %28 = arith.cmpi eq, %21, %27 : vector<1x8x128xi32>
    %cst_7 = arith.constant 0.000000e+00 : f32
    %29 = vector.broadcast %20 : f32 to vector<1x8x128xf32>
    %30 = vector.broadcast %cst_7 : f32 to vector<1x8x128xf32>
    %31 = arith.select %28, %29, %30 : vector<1x8x128xi1>, vector<1x8x128xf32>
    %32 = arith.addf %26, %31 : vector<1x8x128xf32>
    %c0_8 = arith.constant 0 : index
    %c0_9 = arith.constant 0 : index
    %c0_10 = arith.constant 0 : index
    %33 = vector.load %arg4[%c0_8, %c0_9, %c0_10] : memref<1x8x128xf32, #tpu.memory_space<vmem>>, vector<1x8x128xf32>
    tpu.vector_store %arg4[%c0_8, %c0_9, %c0_10], %32 {strides = array<i32>} : memref<1x8x128xf32, #tpu.memory_space<vmem>>, vector<1x8x128xf32>,
    return
  }
  func.func @transform_0(%arg0: i32) -> (i32, i32) {
    %c0_i32 = arith.constant 0 : i32
    %c0_i32_0 = arith.constant 0 : i32
    return %arg0, %c0_i32 : i32, i32
  }
  func.func @transform_1(%arg0: i32) -> (i32, i32) {
    %c0_i32 = arith.constant 0 : i32
    %c0_i32_0 = arith.constant 0 : i32
    %c0_i32_1 = arith.constant 0 : i32
    return %c0_i32, %c0_i32_0 : i32, i32
  }
  func.func @transform_2(%arg0: i32) -> (i32, i32) {
    %c0_i32 = arith.constant 0 : i32
    %c0_i32_0 = arith.constant 0 : i32
    %c0_i32_1 = arith.constant 0 : i32
    return %c0_i32, %c0_i32_0 : i32, i32
  }
  func.func @transform_3(%arg0: i32) -> (i32, i32, i32) {
    %c0_i32 = arith.constant 0 : i32
    %c0_i32_0 = arith.constant 0 : i32
    %c0_i32_1 = arith.constant 0 : i32
    return %arg0, %c0_i32, %c0_i32_0 : i32, i32, i32
  }
}

</mosaic_0001>

<llo_original>
// kernel: tpu_custom_call.1
$region0: #{tpu_custom_call.1}
  #allocation0 [shape = 'u32[]', space=smem, size = 0x4, offset = 0x4, fixed_abs, tag = 'smem constant byte address 0x4 - core index']
  #allocation1 [shape = 'u32[144,128]{1,0:T(1,128)}', space=vmem, size = 0x12000, scoped, tag = 'internal scratch']
  %s0 = inlined_call_operand.hbm [shape: f32[8,256], index: 0, kind: input, shape index: {}]
  %s1 = inlined_call_operand.vmem [shape: f32[1,256], index: 1, kind: input, shape index: {}]
  %s2 = inlined_call_operand.vmem [shape: f32[1,256], index: 2, kind: input, shape index: {}]
  %s3 = inlined_call_operand.hbm [shape: f32[1,8,128], index: 3, kind: output, shape index: {}]
  %s4 = sld [smem:[#allocation0]]
  $region26: #{tpu_custom_call.1} parent=0
    _
  %s6 = ssub.s32 1, %s4
  %s7 = scalar_select 0, %s6, %s4
  $region1: #{tpu_custom_call.1} parent=0
    #allocation2 [shape = 'u8[8192]{0}', space=vmem, size = 0x2000, scoped, tag = 'input window, operand 0, single buffered']
    #allocation3 [shape = 's32[1]{0}', space=sflag, size = 0x4, scoped, tag = 'scoped memory for tpu_custom_call.1']
    #allocation4 [shape = 's32[1]{0}', space=sflag, size = 0x4, scoped, tag = 'scoped memory for tpu_custom_call.1']
    #allocation5 [shape = 'u8[4096]{0}', space=vmem, size = 0x1000, scoped, tag = 'output window, operand 0, single buffered']
    %8 = vsyncpa [#allocation3], 0
    %9 = vsyncpa [#allocation4], 0
    // Predicated region
    $region2: #{tpu_custom_call.1} parent=1 // pred_check
      _
    $region3: #{tpu_custom_call.1} parent=1 // pred_check_branch
      %11 = sbr.rel (0) target = $region5
    $region4: #{tpu_custom_call.1} parent=1 // pred_region
      %s13 = ssub.s32 256, 256
      %14 = vsyncadd [#allocation3], %s13
      %s16 = sshll.u32 [#allocation2], 4
      %s17 = int_to_ptr.vmem [resolvable:$true] %s16
      %19 = dma.hbm_to_vmem [thread:$0]  %s0, 256, %s17, [#allocation3]
    $region5: #{tpu_custom_call.1} parent=1 // pred_fallthru
      _
    // Predicated region
    $region6: #{tpu_custom_call.1} parent=1 // pred_check
      _
    $region7: #{tpu_custom_call.1} parent=1 // pred_check_branch
      %21 = sbr.rel (0) target = $region9
    $region8: #{tpu_custom_call.1} parent=1 // pred_region
      _
    $region9: #{tpu_custom_call.1} parent=1 // pred_fallthru
      _
    // Predicated region
    $region10: #{tpu_custom_call.1} parent=1 // pred_check
      _
    $region11: #{tpu_custom_call.1} parent=1 // pred_check_branch
      %23 = sbr.rel (0) target = $region13
    $region12: #{tpu_custom_call.1} parent=1 // pred_region
      _
    $region13: #{tpu_custom_call.1} parent=1 // pred_fallthru
      _
    // Predicated region
    $region14: #{tpu_custom_call.1} parent=1 // pred_check
      _
    $region15: #{tpu_custom_call.1} parent=1 // pred_check_branch
      %25 = sbr.rel (0) target = $region17
    $region16: #{tpu_custom_call.1} parent=1 // pred_region
      %26 = dma.done [#allocation3], 256
    $region17: #{tpu_custom_call.1} parent=1 // pred_fallthru
      _
    %v27 = vld [vmem:[#allocation2] sm:$0xff]
    %v28 = vld [vmem:[#allocation2 + $0x8] sm:$0xff]
    %29 = vrot.lane.b32.xlu0 %v27, 112
    %v30 = vpop.permute.xlu0 %29
    %31 = vrot.lane.b32.xlu0 %v28, 112
    %v32 = vpop.permute.xlu0 %31
    %v33 = vlaneseq
    %v34 = vand.u32 %v33, 127
    %vm35 = vcmp.lt.s32.totalorder %v34, 112
    %v36 = vsel %vm35, %v30, %v32
    %v37 = vsel %vm35, %v32, %v30
    %v38 = vsub.f32 %v36, %v27
    %v39 = vsub.f32 %v37, %v28
    %v40 = vand.u32 2147483647, %v38
    %v41 = vand.u32 2147483647, %v39
    %v42 = vld [vmem:[%s1] sm:$0x3]
    %v44 = vlaneseq
    %v45 = vshrl.u32 %v44, 7
    %v46 = vsub.s32 0, %v45
    %v47 = vrot.slane %v42, %v46
    %v48 = vlaneseq
    %v49 = vshrl.u32 %v48, 7
    %v50 = vsub.s32 1, %v49
    %v51 = vrot.slane %v42, %v50
    %v54 = vmul.f32 %v40, %v47
    %v55 = vmul.f32 %v41, %v51
    %v56 = vadd.f32 %v54, %v55
    %57 = vadd.xlane.f32.xlu0 %v56
    %v58 = vpop.xlane.xlu0 %57
    %v59 = vrot.slane %v58, 4
    %v60 = vadd.f32 %v58, %v59
    %v61 = vrot.slane %v60, 2
    %v62 = vadd.f32 %v60, %v61
    %v63 = vrot.slane %v62, 1
    %v64 = vadd.f32 %v62, %v63
    %s65 = vtos %v64
    %66 = vrot.lane.b32.xlu0 %v27, 127
    %v67 = vpop.permute.xlu0 %66
    %68 = vrot.lane.b32.xlu0 %v28, 127
    %v69 = vpop.permute.xlu0 %68
    %vm70 = vcmp.lt.s32.totalorder %v34, 127
    %v71 = vsel %vm70, %v67, %v69
    %v72 = vsel %vm70, %v69, %v67
    %v73 = vsub.f32 %v71, %v27
    %v74 = vsub.f32 %v72, %v28
    %v75 = vand.u32 2147483647, %v73
    %v76 = vand.u32 2147483647, %v74
    %v77 = vld [vmem:[%s2] sm:$0x3]
    %v79 = vlaneseq
    %v80 = vshrl.u32 %v79, 7
    %v81 = vsub.s32 0, %v80
    %v82 = vrot.slane %v77, %v81
    %v83 = vlaneseq
    %v84 = vshrl.u32 %v83, 7
    %v85 = vsub.s32 1, %v84
    %v86 = vrot.slane %v77, %v85
    %v89 = vmul.f32 %v75, %v82
    %v90 = vmul.f32 %v76, %v86
    %v91 = vadd.f32 %v89, %v90
    %92 = vadd.xlane.f32.xlu0 %v91
    %v93 = vpop.xlane.xlu0 %92
    %v94 = vrot.slane %v93, 4
    %v95 = vadd.f32 %v93, %v94
    %v96 = vrot.slane %v95, 2
    %v97 = vadd.f32 %v95, %v96
    %v98 = vrot.slane %v97, 1
    %v99 = vadd.f32 %v97, %v98
    %s100 = vtos %v99
    %vm101 = vcmp.eq.s32.totalorder %v34, 0
    %v102 = vstv %s65
    %v103 = vsel %vm101, %v102, 0.0
    %vm104 = vcmp.eq.s32.totalorder %v34, 1
    %v105 = vstv %s100
    %v106 = vsel %vm104, %v105, 0.0
    %v107 = vadd.f32 %v103, %v106
    %108 = vst [vmem:[#allocation5] sm:$0xff] %v107
    // Predicated region
    $region18: #{tpu_custom_call.1} parent=1 // pred_check
      _
    $region19: #{tpu_custom_call.1} parent=1 // pred_check_branch
      %110 = sbr.rel (0) target = $region21
    $region20: #{tpu_custom_call.1} parent=1 // pred_region
      %s112 = ssub.s32 128, 128
      %113 = vsyncadd [#allocation4], %s112
      %s115 = sshll.u32 [#allocation5], 4
      %s116 = int_to_ptr.vmem [resolvable:$true] %s115
      %118 = dma.vmem_to_hbm [thread:$0]  %s116, 128, %s3, [#allocation4]
    $region21: #{tpu_custom_call.1} parent=1 // pred_fallthru
      _
    // Predicated region
    $region22: #{tpu_custom_call.1} parent=1 // pred_check
      _
    $region23: #{tpu_custom_call.1} parent=1 // pred_check_branch
      %120 = sbr.rel (0) target = $region25
    $region24: #{tpu_custom_call.1} parent=1 // pred_region
      %121 = dma.done [#allocation4], 128
    $region25: #{tpu_custom_call.1} parent=1 // pred_fallthru
      _
    %122 = vsyncpa [#allocation3], 1
    %123 = vsyncpa [#allocation4], 1

</llo_original>
